<compile_context>
chip_gen: v7x
topology: tpu7x:2x2x1
jax: 0.10.0
libtpu: 0.0.40
codegen_flags: <defaults>
</compile_context>

<pallas_src>
import jax
import jax.numpy as jnp
from jax.experimental import pallas as pl
from jax.experimental.pallas import tpu as pltpu


NEG_FILL = -1e30  # padding value for unused lanes (exp(NEG_FILL - max) == 0)


# ----------------------------------------------------------------------------
# Fused Pallas kernel: per-feature temperature-scaled softmax over last axis.
# ----------------------------------------------------------------------------
def _fused_softmax_kernel(inv_t_ref, x_ref, o_ref):
    # inv_t_ref : (n_features, 1) f32 in SMEM  -- precomputed 1/temperature
    # x_ref/o_ref: (1, TILE_B, D_pad) tile in VMEM (lane-dense, D_pad % 128 == 0)
    f = pl.program_id(0)
    inv_t = inv_t_ref[f, 0]

    x = x_ref[...].astype(jnp.float32) * inv_t
    m = jnp.max(x, axis=-1, keepdims=True)            # XLU reduction
    e = jnp.exp(x - m)                                 # EUP
    s = jnp.sum(e, axis=-1, keepdims=True)             # XLU reduction
    # approx reciprocal -> EUP slot (co-issues with the rest, VALU stays free)
    o_ref[...] = (e * pl.reciprocal(s, approx=True)).astype(o_ref.dtype)


def _pick_tile_b(B: int) -> int:
    """Largest batch tile (multiple of 8) dividing B, capped so that the
    double-buffered in+out f32 tiles stay a few MiB at most (safe on v7x's
    64 MiB VMEM while still amortizing per-step pipeline overhead)."""
    for t in (1024, 512, 256, 128, 64, 32, 16, 8):
        if B % t == 0:
            return t
    return B  # full-dim block (satisfies the (8,128) rule by equality)


def fused_temperature_softmax(stacked: jax.Array, inv_temps: jax.Array) -> jax.Array:
    """softmax(stacked[f] * inv_temps[f], axis=-1) for every feature slice f,
    in a single pallas_call. `stacked` is (n_features, B, D_pad) with
    D_pad % 128 == 0; padded lanes must already hold NEG_FILL."""
    n_f, B, D_pad = stacked.shape
    assert D_pad % 128 == 0, D_pad
    tile_b = _pick_tile_b(B)

    return pl.pallas_call(
        _fused_softmax_kernel,
        out_shape=jax.ShapeDtypeStruct((n_f, B, D_pad), stacked.dtype),
        grid=(n_f, B // tile_b),
        in_specs=[
            # full (n_features, 1) inverse-temperature table lives in SMEM
            pl.BlockSpec(memory_space=pltpu.MemorySpace.SMEM),
            pl.BlockSpec((1, tile_b, D_pad), lambda f, b: (f, b, 0)),
        ],
        out_specs=pl.BlockSpec((1, tile_b, D_pad), lambda f, b: (f, b, 0)),
        compiler_params=pltpu.CompilerParams(
            dimension_semantics=("parallel", "parallel"),
            vmem_limit_bytes=32 * 1024 * 1024,
        ),
    )(inv_temps, stacked)


# ----------------------------------------------------------------------------
# JAX/Pallas replica of Generator_f (forward pass only).
# ----------------------------------------------------------------------------
def generate_noise(distribution_type, size, key, **kwargs):
    """Deterministic stand-in for the PyTorch generate_noise()."""
    if distribution_type == "normal":
        mean = kwargs.get("mean", 0.0)
        std = kwargs.get("std", 1.0)
        return mean + std * jax.random.normal(key, size, dtype=jnp.float32)
    elif distribution_type == "uniform":
        low = kwargs.get("low", 0.0)
        high = kwargs.get("high", 1.0)
        return jax.random.uniform(key, size, dtype=jnp.float32, minval=low, maxval=high)
    else:
        raise ValueError(f"unsupported distribution_type: {distribution_type}")


class GeneratorF:
    """JAX version of Generator_f; forward uses ONE fused Pallas softmax call."""

    def __init__(self, distribution_type, gen_batch_size, gen_dim_feature, key, **kwargs):
        self.distribution_type = distribution_type
        self.gen_batch_size = gen_batch_size
        self.gen_dim_feature = dict(gen_dim_feature)
        self.feature_name_record = []
        self.params = {}
        for name in gen_dim_feature:
            self.feature_name_record.append(name)
            key, sub = jax.random.split(key)
            self.params[name] = generate_noise(
                distribution_type,
                size=(gen_batch_size, gen_dim_feature[name]),
                key=sub,
                **kwargs,
            )
        # Lane-dense padded slab built once: (n_features, B, D_pad).
        d_max = max(self.gen_dim_feature.values())
        self._d_pad = max(128, ((d_max + 127) // 128) * 128)
        self._stacked = self._build_stacked()

    def _build_stacked(self):
        B, d_pad = self.gen_batch_size, self._d_pad
        slabs = []
        for name in self.feature_name_record:
            p = self.params[name].astype(jnp.float32)
            d = p.shape[1]
            if d < d_pad:
                pad = jnp.full((B, d_pad - d), NEG_FILL, jnp.float32)
                p = jnp.concatenate([p, pad], axis=1)
            slabs.append(p)
        return jnp.stack(slabs, axis=0)

    def forward(self, difficulty_balance):
        inv_t = jnp.asarray(
            [[1.0 / float(difficulty_balance[name])] for name in self.feature_name_record],
            jnp.float32,
        )
        out = fused_temperature_softmax(self._stacked, inv_t)
        batch_data = {}
        for i, name in enumerate(self.feature_name_record):
            d = self.gen_dim_feature[name]
            batch_data[name] = out[i, :, :d]
        return batch_data

    # TODO(synk): pretrain_target_labels / pretrain_distribution are training
    # loops over external teacher models + optimizers; not a kernel concern.


# ----------------------------------------------------------------------------
# Reference (pure jnp) for correctness check.
# ----------------------------------------------------------------------------
def _ref_softmax(x, t):
    z = x.astype(jnp.float32) / t
    z = z - jnp.max(z, axis=1, keepdims=True)
    e = jnp.exp(z)
    return e / jnp.sum(e, axis=1, keepdims=True)


if __name__ == "__main__":
    key = jax.random.PRNGKey(0)

    gen_batch_size = 8
    gen_dim_feature = {"user": 16, "item": 32, "context": 8}
    difficulty_balance = {"user": 1.0, "item": 2.0, "context": 0.5}

    gen = GeneratorF(
        distribution_type="normal",
        gen_batch_size=gen_batch_size,
        gen_dim_feature=gen_dim_feature,
        key=key,
        mean=0.0,
        std=1.0,
    )

    out = gen.forward(difficulty_balance)
    out = jax.tree_util.tree_map(jax.block_until_ready, out)

    # Verify against the pure-JAX reference (tolerance loosened slightly for the
    # EUP approx reciprocal used in the softmax denominator).
    for name in gen.feature_name_record:
        ref = _ref_softmax(gen.params[name], difficulty_balance[name])
        got = out[name]
        assert got.shape == (gen_batch_size, gen_dim_feature[name]), got.shape
        assert jnp.allclose(got, ref, atol=1e-4, rtol=5e-3), name
        # softmax rows sum to ~1
        assert jnp.allclose(jnp.sum(got, axis=1), 1.0, atol=5e-3)

    print("KERNEL_OK")
</pallas_src>

<mosaic_0001>
module attributes {stable_mosaic.version = 11 : i64} {
  func.func @_fused_softmax_kernel(%arg0: i32, %arg1: i32, %arg2: memref<3x1xf32, #tpu.memory_space<smem>>, %arg3: memref<1x8x128xf32, #tpu.memory_space<vmem>>, %arg4: memref<1x8x128xf32, #tpu.memory_space<vmem>>) attributes {dimension_semantics = [#tpu.dimension_semantics<parallel>, #tpu.dimension_semantics<parallel>], iteration_bounds = array<i64: 3, 1>, scalar_prefetch = 0 : i64, scratch_operands = 0 : i64, tpu.core_type = #tpu.core_type<tc>, window_params = [{transform_indices = @transform_0, window_bounds = array<i64: 3, 1>}, {transform_indices = @transform_1, window_bounds = array<i64: 1, 8, 128>}, {transform_indices = @transform_2, window_bounds = array<i64: 1, 8, 128>}]} {
    %0 = arith.index_cast %arg0 : i32 to index
    %c0 = arith.constant 0 : index
    %1 = memref.load %arg2[%0, %c0] : memref<3x1xf32, #tpu.memory_space<smem>>
    %c0_0 = arith.constant 0 : index
    %c0_1 = arith.constant 0 : index
    %c0_2 = arith.constant 0 : index
    %2 = vector.load %arg3[%c0_0, %c0_1, %c0_2] : memref<1x8x128xf32, #tpu.memory_space<vmem>>, vector<1x8x128xf32>
    %3 = vector.broadcast %1 : f32 to vector<1x8x128xf32>
    %4 = arith.mulf %2, %3 : vector<1x8x128xf32>
    %cst = arith.constant dense<0xFF800000> : vector<1x8xf32>
    %5 = vector.multi_reduction <maximumf>, %4, %cst [2] : vector<1x8x128xf32> to vector<1x8xf32>
    %6 = vector.shape_cast %5 : vector<1x8xf32> to vector<1x8x1xf32>
    %7 = vector.broadcast %6 : vector<1x8x1xf32> to vector<1x8x128xf32>
    %8 = arith.subf %4, %7 : vector<1x8x128xf32>
    %9 = math.exp %8 : vector<1x8x128xf32>
    %cst_3 = arith.constant dense<0.000000e+00> : vector<1x8xf32>
    %10 = vector.multi_reduction <add>, %9, %cst_3 [2] : vector<1x8x128xf32> to vector<1x8xf32>
    %11 = vector.shape_cast %10 : vector<1x8xf32> to vector<1x8x1xf32>
    %12 = tpu.reciprocal %11 {approx = true} : vector<1x8x1xf32> -> vector<1x8x1xf32>
    %13 = vector.broadcast %12 : vector<1x8x1xf32> to vector<1x8x128xf32>
    %14 = arith.mulf %9, %13 : vector<1x8x128xf32>
    %c0_4 = arith.constant 0 : index
    %c0_5 = arith.constant 0 : index
    %c0_6 = arith.constant 0 : index
    %15 = vector.load %arg4[%c0_4, %c0_5, %c0_6] : memref<1x8x128xf32, #tpu.memory_space<vmem>>, vector<1x8x128xf32>
    tpu.vector_store %arg4[%c0_4, %c0_5, %c0_6], %14 {strides = array<i32>} : memref<1x8x128xf32, #tpu.memory_space<vmem>>, vector<1x8x128xf32>,
    return
  }
  func.func @transform_0(%arg0: i32, %arg1: i32) -> (i32, i32) {
    %c0_i32 = arith.constant 0 : i32
    %c0_i32_0 = arith.constant 0 : i32
    %c0_i32_1 = arith.constant 0 : i32
    return %c0_i32, %c0_i32_0 : i32, i32
  }
  func.func @transform_1(%arg0: i32, %arg1: i32) -> (i32, i32, i32) {
    %c0_i32 = arith.constant 0 : i32
    %c0_i32_0 = arith.constant 0 : i32
    return %arg0, %arg1, %c0_i32 : i32, i32, i32
  }
  func.func @transform_2(%arg0: i32, %arg1: i32) -> (i32, i32, i32) {
    %c0_i32 = arith.constant 0 : i32
    %c0_i32_0 = arith.constant 0 : i32
    return %arg0, %arg1, %c0_i32 : i32, i32, i32
  }
}

</mosaic_0001>

<llo_original>
// kernel: tpu_custom_call.1
$region0: #{tpu_custom_call.1}
  #allocation0 [shape = 'u32[]', space=smem, size = 0x4, offset = 0x4, fixed_abs, tag = 'smem constant byte address 0x4 - core index']
  #allocation1 [shape = 'u32[144,128]{1,0:T(1,128)}', space=vmem, size = 0x12000, scoped, tag = 'internal scratch']
  %s0 = inlined_call_operand.vmem [shape: f32[3,1], index: 0, kind: input, shape index: {}]
  %s1 = inlined_call_operand.hbm [shape: f32[3,8,128], index: 1, kind: input, shape index: {}]
  %s2 = inlined_call_operand.hbm [shape: f32[3,8,128], index: 2, kind: output, shape index: {}]
  %s3 = sld [smem:[#allocation0]]
  $region49: #{tpu_custom_call.1} parent=0
    _
  %s5 = ssub.s32 1, %s3
  %s6 = scalar_select 0, %s5, %s3
  $region1: #{tpu_custom_call.1} parent=0
    #allocation2 [shape = 'u8[2048]{0}', space=smem, size = 0x800, scoped, tag = 'input window, operand 0, single buffered']
    #allocation3 [shape = 's32[2]{0}', space=sflag, size = 0x8, scoped, tag = 'scoped memory for tpu_custom_call.1']
    #allocation4 [shape = 's32[2]{0}', space=sflag, size = 0x8, scoped, tag = 'scoped memory for tpu_custom_call.1']
    #allocation5 [shape = 's32[2]{0}', space=sflag, size = 0x8, scoped, tag = 'scoped memory for tpu_custom_call.1']
    #allocation6 [shape = 'u8[8192]{0}', space=vmem, size = 0x2000, scoped, tag = 'input window, operand 1']
    #allocation7 [shape = 'u8[8192]{0}', space=vmem, size = 0x2000, scoped, tag = 'output window, operand 0']
    %7 = vsyncpa [#allocation5], 0
    %8 = vsyncpa [#allocation3], 0
    %s9 = scalar_lea.sflag [#allocation3], 1
    %10 = vsyncpa %s9, 0
    %11 = vsyncpa [#allocation4], 0
    %s12 = scalar_lea.sflag [#allocation4], 1
    %13 = vsyncpa %s12, 0
    loop: start=0, step=1, limit=5
    $region2: #{tpu_custom_call.1} parent=1 // loop_pre_header
      _
    $region3: #{tpu_custom_call.1} parent=1 // loop_header
      %s15 = sphi 0, %s19
      %p16 = scmp.ge.s32.totalorder %s15, 5
      %s22 = sphi 0, %s34
      %s23 = sphi 0, %s30
      %s24 = sphi 0, %s22
      %s25 = sphi 0, %s23
      %s26 = sphi 0, %s24
      %s27 = sphi 0, %s25
      %s35 = sphi 0, %s35
      %s37 = sphi 0, %s35
      %s38 = sphi 0, %s37
      %s52 = sphi 0, %s38
      %s60 = sphi 0, %s62
      %s63 = sphi 0, %s60
      %s64 = sphi 0, %s63
      %s80 = sphi 0, %s64
      %s88 = sphi 0, %s90
      %s91 = sphi 0, %s88
      %s92 = sphi 0, %s91
      %s108 = sphi 0, %s92
    $region4: #{tpu_custom_call.1} parent=1 // loop_header_branch
      %18 = sbr.rel (%p16) target = $region8
    $region5: #{tpu_custom_call.1} parent=1 // loop_body
      %s20 = ssub.s32 %s15, 1
      %s21 = ssub.s32 %s15, 2
      %s28 = sadd.s32 1, %s23
      %p29 = scmp.ge.s32.totalorder %s28, 1
      %s30 = scalar_select %p29, 0, %s28
      %s31 = sadd.s32 1, %s22
      %s32 = scalar_select %p29, %s31, %s22
      %p33 = scmp.ge.s32.totalorder %s32, 3
      %s34 = scalar_select %p33, 0, %s32
      %s36 = sadd.s32 %s35, 1
      %p39 = scmp.eq.s32.totalorder %s15, 2
      %p40 = scmp.ne.s32.totalorder %s35, %s37
      %p41 = scmp.eq.s32.totalorder %s15, 0
      %p42 = por %p40, %p41
      %p43 = scmp.ne.s32.totalorder %s35, %s37
      %p44 = scmp.eq.s32.totalorder %s20, 2
      %p45 = por %p43, %p44
      %p46 = scmp.ne.s32.totalorder %s37, %s38
      %p47 = scmp.eq.s32.totalorder %s20, 0
      %p48 = por %p46, %p47
      %p49 = scmp.ne.s32.totalorder %s37, %s38
      %p50 = scmp.eq.s32.totalorder %s21, 2
      %p51 = por %p49, %p50
      %p53 = scmp.ne.s32.totalorder %s38, %s52
      %p54 = scmp.eq.s32.totalorder %s21, 0
      %p55 = por %p53, %p54
      %s56 = ssub.s32 %s22, %s34
      %s57 = ssub.s32 %s23, %s30
      %s58 = sor.u32 %s56, %s57
      %p59 = scmp.eq.s32.totalorder %s58, 0
      %s61 = sadd.s32 %s60, 1
      %s62 = scalar_select %p59, %s60, %s61
      %p65 = pneg %p59
      %p66 = scmp.eq.s32.totalorder %s15, 2
      %p67 = por %p65, %p66
      %p68 = scmp.ne.s32.totalorder %s60, %s63
      %p69 = scmp.eq.s32.totalorder %s15, 0
      %p70 = por %p68, %p69
      %p71 = scmp.ne.s32.totalorder %s60, %s63
      %p72 = scmp.eq.s32.totalorder %s20, 2
      %p73 = por %p71, %p72
      %p74 = scmp.ne.s32.totalorder %s63, %s64
      %p75 = scmp.eq.s32.totalorder %s20, 0
      %p76 = por %p74, %p75
      %p77 = scmp.ne.s32.totalorder %s63, %s64
      %p78 = scmp.eq.s32.totalorder %s21, 2
      %p79 = por %p77, %p78
      %p81 = scmp.ne.s32.totalorder %s64, %s80
      %p82 = scmp.eq.s32.totalorder %s21, 0
      %p83 = por %p81, %p82
      %s84 = ssub.s32 %s22, %s34
      %s85 = ssub.s32 %s23, %s30
      %s86 = sor.u32 %s84, %s85
      %p87 = scmp.eq.s32.totalorder %s86, 0
      %s89 = sadd.s32 %s88, 1
      %s90 = scalar_select %p87, %s88, %s89
      %p93 = pneg %p87
      %p94 = scmp.eq.s32.totalorder %s15, 2
      %p95 = por %p93, %p94
      %p96 = scmp.ne.s32.totalorder %s88, %s91
      %p97 = scmp.eq.s32.totalorder %s15, 0
      %p98 = por %p96, %p97
      %p99 = scmp.ne.s32.totalorder %s88, %s91
      %p100 = scmp.eq.s32.totalorder %s20, 2
      %p101 = por %p99, %p100
      %p102 = scmp.ne.s32.totalorder %s91, %s92
      %p103 = scmp.eq.s32.totalorder %s20, 0
      %p104 = por %p102, %p103
      %p105 = scmp.ne.s32.totalorder %s91, %s92
      %p106 = scmp.eq.s32.totalorder %s21, 2
      %p107 = por %p105, %p106
      %p109 = scmp.ne.s32.totalorder %s92, %s108
      %p110 = scmp.eq.s32.totalorder %s21, 0
      %p111 = por %p109, %p110
      %p112 = scmp.le.s32.totalorder 1, %s15
      %p113 = scmp.lt.s32.totalorder %s15, 4
      %p114 = pnand %p112, %p113
      %p115 = pneg %p114
      // Predicated region
      $region9: #{tpu_custom_call.1} parent=5 // pred_check
        _
      $region10: #{tpu_custom_call.1} parent=5 // pred_check_branch
        %117 = sbr.rel (%p114) target = $region12
      $region11: #{tpu_custom_call.1} parent=5 // pred_region
        %s118 = ssub.s32 %s15, 1
        // Predicated region
        $region13: #{tpu_custom_call.1} parent=11 // pred_check
          %p119 = pneg %p48
        $region14: #{tpu_custom_call.1} parent=11 // pred_check_branch
          %121 = sbr.rel (%p119) target = $region16
        $region15: #{tpu_custom_call.1} parent=11 // pred_region
          %s123 = ssub.s32 64, 64
          %124 = vsyncadd [#allocation5], %s123
          %s126 = sshll.u32 %s0, 4
          %s127 = int_to_ptr.vmem [resolvable:$true] %s126
          %129 = dma.vmem_to_smem %s127, 64, [#allocation2], [#allocation5]
        $region16: #{tpu_custom_call.1} parent=11 // pred_fallthru
          _
      $region12: #{tpu_custom_call.1} parent=5 // pred_fallthru
        _
      %p130 = scmp.lt.s32.totalorder %s15, 3
      // Predicated region
      $region17: #{tpu_custom_call.1} parent=5 // pred_check
        %p131 = pneg %p130
      $region18: #{tpu_custom_call.1} parent=5 // pred_check_branch
        %133 = sbr.rel (%p131) target = $region20
      $region19: #{tpu_custom_call.1} parent=5 // pred_region
        // Predicated region
        $region21: #{tpu_custom_call.1} parent=19 // pred_check
          %p134 = pneg %p70
        $region22: #{tpu_custom_call.1} parent=19 // pred_check_branch
          %136 = sbr.rel (%p134) target = $region24
        $region23: #{tpu_custom_call.1} parent=19 // pred_region
          %s137 = sand.u32 %s60, 1
          %s138 = scalar_lea.sflag [#allocation3], %s137
          %s139 = sand.u32 %s60, 1
          %s140 = smul.addr %s139, 8
          %s141 = scalar_lea.vmem [#allocation6], %s140
          %s143 = ssub.s32 128, 128
          %144 = vsyncadd %s138, %s143
          %s145 = sadd.s32 %s23, %s22
          %s146 = smul.addr %s145, 128
          %s147 = scalar_lea.hbm %s1, %s146
          %s149 = sshll.u32 %s141, 4
          %s150 = int_to_ptr.vmem [resolvable:$true] %s149
          %152 = dma.hbm_to_vmem [thread:$0]  %s147, 128, %s150, %s138
        $region24: #{tpu_custom_call.1} parent=19 // pred_fallthru
          _
      $region20: #{tpu_custom_call.1} parent=5 // pred_fallthru
        _
      %p153 = scmp.le.s32.totalorder 1, %s15
      %p154 = scmp.lt.s32.totalorder %s15, 4
      %p155 = pnand %p153, %p154
      %p156 = pneg %p155
      // Predicated region
      $region25: #{tpu_custom_call.1} parent=5 // pred_check
        _
      $region26: #{tpu_custom_call.1} parent=5 // pred_check_branch
        %158 = sbr.rel (%p155) target = $region28
      $region27: #{tpu_custom_call.1} parent=5 // pred_region
        %s159 = ssub.s32 %s15, 1
        // Predicated region
        $region29: #{tpu_custom_call.1} parent=27 // pred_check
          %p160 = pneg %p48
        $region30: #{tpu_custom_call.1} parent=27 // pred_check_branch
          %162 = sbr.rel (%p160) target = $region32
        $region31: #{tpu_custom_call.1} parent=27 // pred_region
          %163 = dma.done [#allocation5], 64
        $region32: #{tpu_custom_call.1} parent=27 // pred_fallthru
          _
        %s164 = sand.u32 %s63, 1
        %s165 = scalar_lea.sflag [#allocation3], %s164
        %s166 = sand.u32 %s63, 1
        %s167 = smul.addr %s166, 8
        %s168 = scalar_lea.vmem [#allocation6], %s167
        // Predicated region
        $region33: #{tpu_custom_call.1} parent=27 // pred_check
          %p169 = pneg %p76
        $region34: #{tpu_custom_call.1} parent=27 // pred_check_branch
          %171 = sbr.rel (%p169) target = $region36
        $region35: #{tpu_custom_call.1} parent=27 // pred_region
          %172 = dma.done %s165, 128
        $region36: #{tpu_custom_call.1} parent=27 // pred_fallthru
          _
        %173 = sfence
        %p174 = pneg %p48
        %p175 = pneg %p45
        %s176 = sand.u32 %s63, 1
        %s177 = scalar_lea.sflag [#allocation3], %s176
        %s178 = sand.u32 %s63, 1
        %s179 = smul.addr %s178, 8
        %s180 = scalar_lea.vmem [#allocation6], %s179
        %p181 = pneg %p76
        %p182 = pneg %p73
        %p183 = pneg %p104
        %p184 = pneg %p101
        %s185 = sand.u32 %s91, 1
        %s186 = scalar_lea.sflag [#allocation4], %s185
        %s187 = sand.u32 %s91, 1
        %s188 = smul.addr %s187, 8
        %s189 = scalar_lea.vmem [#allocation7], %s188
        %s190 = smul.u32 %s24, 128
        %s191 = sld [smem:[#allocation2 + %s190]]
        %v192 = vld [vmem:[%s168] sm:$0xff]
        %v193 = vstv %s191
        %v194 = vmul.f32 %v192, %v193
        %195 = vmax.xlane.f32.xlu0 %v194
        %v196 = vpop.xlane.xlu0 %195
        %v197 = vsub.f32 %v194, %v196
        %v198 = vmul.f32 %v197, 1.442695
        %v199 = vpow.pop %v198
        %200 = vadd.xlane.f32.xlu0 %v199
        %v201 = vpop.xlane.xlu0 %200
        %v202 = vrcp.pop %v201
        %v203 = vmul.f32 %v199, %v202
        %204 = vst [vmem:[%s189] sm:$0xff] %v203
        %s205 = sand.u32 %s91, 1
        %s206 = scalar_lea.sflag [#allocation4], %s205
        %s207 = sand.u32 %s91, 1
        %s208 = smul.addr %s207, 8
        %s209 = scalar_lea.vmem [#allocation7], %s208
        // Predicated region
        $region37: #{tpu_custom_call.1} parent=27 // pred_check
          %p210 = pneg %p101
        $region38: #{tpu_custom_call.1} parent=27 // pred_check_branch
          %212 = sbr.rel (%p210) target = $region40
        $region39: #{tpu_custom_call.1} parent=27 // pred_region
          %s214 = ssub.s32 128, 128
          %215 = vsyncadd %s206, %s214
          %s216 = sadd.s32 %s25, %s24
          %s217 = smul.addr %s216, 128
          %s218 = scalar_lea.hbm %s2, %s217
          %s220 = sshll.u32 %s209, 4
          %s221 = int_to_ptr.vmem [resolvable:$true] %s220
          %223 = dma.vmem_to_hbm [thread:$0]  %s221, 128, %s218, %s206
        $region40: #{tpu_custom_call.1} parent=27 // pred_fallthru
          _
      $region28: #{tpu_custom_call.1} parent=5 // pred_fallthru
        _
      %p224 = scmp.le.s32.totalorder 2, %s15
      // Predicated region
      $region41: #{tpu_custom_call.1} parent=5 // pred_check
        %p225 = pneg %p224
      $region42: #{tpu_custom_call.1} parent=5 // pred_check_branch
        %227 = sbr.rel (%p225) target = $region44
      $region43: #{tpu_custom_call.1} parent=5 // pred_region
        %s228 = ssub.s32 %s15, 2
        // Predicated region
        $region45: #{tpu_custom_call.1} parent=43 // pred_check
          %p229 = pneg %p107
        $region46: #{tpu_custom_call.1} parent=43 // pred_check_branch
          %231 = sbr.rel (%p229) target = $region48
        $region47: #{tpu_custom_call.1} parent=43 // pred_region
          %s232 = sand.u32 %s92, 1
          %s233 = scalar_lea.sflag [#allocation4], %s232
          %s234 = sand.u32 %s92, 1
          %s235 = smul.addr %s234, 8
          %s236 = scalar_lea.vmem [#allocation7], %s235
          %237 = dma.done %s233, 128
        $region48: #{tpu_custom_call.1} parent=43 // pred_fallthru
          _
      $region44: #{tpu_custom_call.1} parent=5 // pred_fallthru
        _
    $region6: #{tpu_custom_call.1} parent=1 // loop_footer
      %s19 = sadd.s32 1, %s15
    $region7: #{tpu_custom_call.1} parent=1 // loop_footer_branch
      %14 = sbr.rel target = $region3
    $region8: #{tpu_custom_call.1} parent=1 // loop_exit
      _
    %238 = vsyncpa [#allocation3], 1
    %s239 = scalar_lea.sflag [#allocation3], 1
    %240 = vsyncpa %s239, 1
    %241 = vsyncpa [#allocation4], 1
    %s242 = scalar_lea.sflag [#allocation4], 1
    %243 = vsyncpa %s242, 1
    %244 = vsyncpa [#allocation5], 1
    %s245 = scalar_lea.sflag [#allocation5], 1
    %246 = vsyncpa %s245, 1

</llo_original>
